<compile_context>
chip_gen: v6e
topology: v6e:2x2x1
jax: 0.10.0
libtpu: 0.0.40
codegen_flags: <defaults>
</compile_context>

<pallas_src>
import functools

import jax
import jax.numpy as jnp
from jax.experimental import pallas as pl
from jax.experimental.pallas import tpu as pltpu

HIDDEN = 768
NUM_CLASSES = 2
C_PAD = 128          # pad the class dim to one full 128-lane register
TM_MAX = 512         # row tile (sweet spot for HBM-roofline pipelining)
NEG_BIG = -1e30      # baked into padded bias lanes; exp underflows to 0


def _head_kernel(x_ref, m_ref, w_ref, b_ref, o_ref):
    """Fused mask-mul + fc (Linear) + log_softmax over the class axis."""
    # apply the attention/input mask as free VPU work under the DMA/MXU
    x = x_ref[...] * m_ref[...]                              # [TM, H] bf16
    # fc: [TM, H] @ [H, C_PAD] (MXU, f32 accumulation) + bias
    logits = jnp.dot(x, w_ref[...], preferred_element_type=jnp.float32)
    logits = logits + b_ref[...]                             # padded lanes get -1e30
    # numerically stable log_softmax over the class (lane) axis
    mx = jnp.max(logits, axis=-1, keepdims=True)
    z = logits - mx
    lse = jnp.log(jnp.sum(jnp.exp(z), axis=-1, keepdims=True))
    o_ref[...] = (z - lse).astype(o_ref.dtype)


def classifier_head(x, mask, w_pad, b_pad, num_classes):
    """x: [M, H] bf16, mask: [M, 1] bf16, w_pad: [H, C_PAD] bf16,
    b_pad: [1, C_PAD] f32  ->  log-probs [M, num_classes] f32."""
    M, H = x.shape
    # block sublane dim must be a multiple of 8 OR equal the full extent
    TM = M if M <= TM_MAX else TM_MAX
    grid = pl.cdiv(M, TM)

    out = pl.pallas_call(
        _head_kernel,
        out_shape=jax.ShapeDtypeStruct((M, C_PAD), jnp.float32),
        grid=(grid,),
        in_specs=[
            pl.BlockSpec((TM, H), lambda i: (i, 0)),       # x tile (pipelined)
            pl.BlockSpec((TM, 1), lambda i: (i, 0)),       # mask tile
            pl.BlockSpec((H, C_PAD), lambda i: (0, 0)),    # weight, resident
            pl.BlockSpec((1, C_PAD), lambda i: (0, 0)),    # bias, resident
        ],
        out_specs=pl.BlockSpec((TM, C_PAD), lambda i: (i, 0)),
        compiler_params=pltpu.CompilerParams(
            dimension_semantics=("parallel",),
        ),
    )(x, mask, w_pad, b_pad)
    return out[:, :num_classes]


def _forward_impl(params, input_ids, input_mask, segment_ids, *, num_classes):
    B, S = input_ids.shape
    # emulated BERT layer-11 hidden state [B, S, H] (glue, fused by XLA)
    h = params["word_emb"][input_ids] + params["seg_emb"][segment_ids]
    H = h.shape[-1]
    x = h.reshape(B * S, H).astype(jnp.bfloat16)
    mask = input_mask.reshape(B * S, 1).astype(jnp.bfloat16)
    # nn.Dropout() is the identity at inference (eval mode)
    # TODO(synk): torch F.log_softmax with no dim on a 3-D tensor legacy-defaults to
    # dim=0; we apply it over the class axis (the author's evident intent).
    logp = classifier_head(x, mask, params["fc_w_pad"], params["fc_b_pad"], num_classes)
    return logp.reshape(B, S, num_classes)


class NeuralNetPallas:
    """JAX/Pallas port of the PyTorch NeuralNet forward pass (inference)."""

    def __init__(self, hidden_size=768, num_classes=2, vocab_size=1000,
                 type_vocab_size=2, seed=0):
        # TODO(synk): the pretrained 'bert-base-uncased' encoder cannot be
        # reproduced in-script; its layer-11 hidden state is emulated with
        # deterministic embedding tables feeding the same [B, S, hidden]
        # tensor the original head consumes.
        k = jax.random.PRNGKey(seed)
        kw, kt, kfw = jax.random.split(k, 3)
        word_emb = 0.02 * jax.random.normal(kw, (vocab_size, hidden_size), jnp.float32)
        seg_emb = 0.02 * jax.random.normal(kt, (type_vocab_size, hidden_size), jnp.float32)
        # nn.Linear(hidden_size, num_classes): torch weight is [C, H]; stored
        # transposed + lane-padded here, in bf16 (MXU-native input dtype).
        fc_w = 0.02 * jax.random.normal(kfw, (hidden_size, num_classes), jnp.float32)
        fc_w_pad = jnp.zeros((hidden_size, C_PAD), jnp.float32).at[:, :num_classes].set(fc_w)
        # bias stays f32; padded class lanes carry -1e30 so the softmax masks
        # them for free (exp underflows to 0 after the max subtraction).
        fc_b_pad = jnp.full((1, C_PAD), NEG_BIG, jnp.float32).at[0, :num_classes].set(0.0)

        self.params = {
            "word_emb": word_emb,
            "seg_emb": seg_emb,
            "fc_w_pad": fc_w_pad.astype(jnp.bfloat16),
            "fc_b_pad": fc_b_pad,
        }
        self.hidden_size = hidden_size
        self.num_classes = num_classes
        self._jit_forward = jax.jit(
            functools.partial(_forward_impl, num_classes=num_classes))

    def __call__(self, input_ids, input_mask, segment_ids):
        return self._jit_forward(self.params, input_ids, input_mask, segment_ids)


if __name__ == "__main__":
    key = jax.random.PRNGKey(0)
    B, S = 2, 8
    k_ids, _ = jax.random.split(key)
    input_ids = jax.random.randint(k_ids, (B, S), 0, 1000, dtype=jnp.int32)
    input_mask = jnp.ones((B, S), jnp.int32)
    segment_ids = jnp.zeros((B, S), jnp.int32)

    model = NeuralNetPallas(hidden_size=HIDDEN, num_classes=NUM_CLASSES, vocab_size=1000)
    out = model(input_ids, input_mask, segment_ids)
    jax.block_until_ready(out)

    # sanity: rows are valid log-probabilities
    assert out.shape == (B, S, NUM_CLASSES)
    assert bool(jnp.all(jnp.abs(jnp.sum(jnp.exp(out), axis=-1) - 1.0) < 1e-4))
    print("KERNEL_OK")
</pallas_src>

<mosaic_0001>
module attributes {stable_mosaic.version = 11 : i64} {
  func.func @_head_kernel(%arg0: i32, %arg1: memref<16x768xbf16, #tpu.memory_space<vmem>>, %arg2: memref<16x1xbf16, #tpu.memory_space<vmem>>, %arg3: memref<768x128xbf16, #tpu.memory_space<vmem>>, %arg4: memref<1x128xf32, #tpu.memory_space<vmem>>, %arg5: memref<16x128xf32, #tpu.memory_space<vmem>>) attributes {dimension_semantics = [#tpu.dimension_semantics<parallel>], iteration_bounds = array<i64: 1>, scalar_prefetch = 0 : i64, scratch_operands = 0 : i64, tpu.core_type = #tpu.core_type<tc>, window_params = [{transform_indices = @transform_0, window_bounds = array<i64: 16, 768>}, {transform_indices = @transform_1, window_bounds = array<i64: 16, 1>}, {pipeline_mode = #tpu.pipeline_mode<synchronous>, transform_indices = @transform_2, window_bounds = array<i64: 768, 128>}, {pipeline_mode = #tpu.pipeline_mode<synchronous>, transform_indices = @transform_3, window_bounds = array<i64: 1, 128>}, {transform_indices = @transform_4, window_bounds = array<i64: 16, 128>}]} {
    %c0 = arith.constant 0 : index
    %c0_0 = arith.constant 0 : index
    %0 = vector.load %arg1[%c0, %c0_0] : memref<16x768xbf16, #tpu.memory_space<vmem>>, vector<16x768xbf16>
    %c0_1 = arith.constant 0 : index
    %c0_2 = arith.constant 0 : index
    %1 = vector.load %arg2[%c0_1, %c0_2] : memref<16x1xbf16, #tpu.memory_space<vmem>>, vector<16x1xbf16>
    %2 = vector.broadcast %1 : vector<16x1xbf16> to vector<16x768xbf16>
    %3 = arith.mulf %0, %2 : vector<16x768xbf16>
    %c0_3 = arith.constant 0 : index
    %c0_4 = arith.constant 0 : index
    %4 = vector.load %arg3[%c0_3, %c0_4] : memref<768x128xbf16, #tpu.memory_space<vmem>>, vector<768x128xbf16>
    %cst = arith.constant dense<0.000000e+00> : vector<16x128xf32>
    %5 = tpu.matmul %3, %4, %cst {dimension_numbers = #tpu.dot_dimension_numbers<[1], [0], [0], [1], [0, 0, 1, 1], [], []>} : vector<16x768xbf16>, vector<768x128xbf16>, vector<16x128xf32> -> vector<16x128xf32>
    %c0_5 = arith.constant 0 : index
    %c0_6 = arith.constant 0 : index
    %6 = vector.load %arg4[%c0_5, %c0_6] : memref<1x128xf32, #tpu.memory_space<vmem>>, vector<1x128xf32>
    %7 = vector.broadcast %6 : vector<1x128xf32> to vector<16x128xf32>
    %8 = arith.addf %5, %7 : vector<16x128xf32>
    %cst_7 = arith.constant dense<0xFF800000> : vector<16xf32>
    %9 = vector.multi_reduction <maximumf>, %8, %cst_7 [1] : vector<16x128xf32> to vector<16xf32>
    %10 = vector.shape_cast %9 : vector<16xf32> to vector<16x1xf32>
    %11 = vector.broadcast %10 : vector<16x1xf32> to vector<16x128xf32>
    %12 = arith.subf %8, %11 : vector<16x128xf32>
    %13 = math.exp %12 : vector<16x128xf32>
    %cst_8 = arith.constant dense<0.000000e+00> : vector<16xf32>
    %14 = vector.multi_reduction <add>, %13, %cst_8 [1] : vector<16x128xf32> to vector<16xf32>
    %15 = vector.shape_cast %14 : vector<16xf32> to vector<16x1xf32>
    %16 = math.log %15 : vector<16x1xf32>
    %17 = vector.broadcast %16 : vector<16x1xf32> to vector<16x128xf32>
    %18 = arith.subf %12, %17 : vector<16x128xf32>
    %c0_9 = arith.constant 0 : index
    %c0_10 = arith.constant 0 : index
    %19 = vector.load %arg5[%c0_9, %c0_10] : memref<16x128xf32, #tpu.memory_space<vmem>>, vector<16x128xf32>
    tpu.vector_store %arg5[%c0_9, %c0_10], %18 {strides = array<i32>} : memref<16x128xf32, #tpu.memory_space<vmem>>, vector<16x128xf32>,
    return
  }
  func.func @transform_0(%arg0: i32) -> (i32, i32) {
    %c0_i32 = arith.constant 0 : i32
    %c0_i32_0 = arith.constant 0 : i32
    return %arg0, %c0_i32 : i32, i32
  }
  func.func @transform_1(%arg0: i32) -> (i32, i32) {
    %c0_i32 = arith.constant 0 : i32
    %c0_i32_0 = arith.constant 0 : i32
    return %arg0, %c0_i32 : i32, i32
  }
  func.func @transform_2(%arg0: i32) -> (i32, i32) {
    %c0_i32 = arith.constant 0 : i32
    %c0_i32_0 = arith.constant 0 : i32
    %c0_i32_1 = arith.constant 0 : i32
    return %c0_i32, %c0_i32_0 : i32, i32
  }
  func.func @transform_3(%arg0: i32) -> (i32, i32) {
    %c0_i32 = arith.constant 0 : i32
    %c0_i32_0 = arith.constant 0 : i32
    %c0_i32_1 = arith.constant 0 : i32
    return %c0_i32, %c0_i32_0 : i32, i32
  }
  func.func @transform_4(%arg0: i32) -> (i32, i32) {
    %c0_i32 = arith.constant 0 : i32
    %c0_i32_0 = arith.constant 0 : i32
    return %arg0, %c0_i32 : i32, i32
  }
}

</mosaic_0001>

<llo_original>
// kernel: _forward_impl.1
$region0: #{_forward_impl.1}
  #allocation0 [shape = 'u32[]', space=smem, size = 0x4, offset = 0x4, fixed_abs, tag = 'smem constant byte address 0x4 - core index']
  #allocation1 [shape = 'u32[144,128]{1,0:T(1,128)}', space=vmem, size = 0x12000, scoped, tag = 'internal scratch']
  %s0 = inlined_call_operand.vmem [shape: bf16[16,768], index: 0, kind: input, shape index: {}]
  %s1 = inlined_call_operand.vmem [shape: bf16[16,1], index: 1, kind: input, shape index: {}]
  %s2 = inlined_call_operand.hbm [shape: bf16[768,128], index: 2, kind: input, shape index: {}]
  %s3 = inlined_call_operand.hbm [shape: f32[1,128], index: 3, kind: input, shape index: {}]
  %s4 = inlined_call_operand.vmem [shape: f32[16,128], index: 4, kind: output, shape index: {}]
  %s5 = sld [smem:[#allocation0]]
  $region34: #{_forward_impl.1} parent=0
    _
  %s7 = ssub.s32 1, %s5
  %s8 = scalar_select 0, %s7, %s5
  $region1: #{_forward_impl.1} parent=0
    #allocation2 [shape = 'u8[196608]{0}', space=vmem, size = 0x30000, scoped, tag = 'input window, operand 2, single buffered']
    #allocation3 [shape = 's32[1]{0}', space=sflag, size = 0x4, scoped, tag = 'scoped memory for _forward_impl.1']
    #allocation4 [shape = 'u8[512]{0}', space=vmem, size = 0x400, scoped, tag = 'input window, operand 3, single buffered']
    #allocation5 [shape = 's32[1]{0}', space=sflag, size = 0x4, scoped, tag = 'scoped memory for _forward_impl.1']
    %9 = vsyncpa [#allocation3], 0
    %10 = vsyncpa [#allocation5], 0
    // Predicated region
    $region2: #{_forward_impl.1} parent=1 // pred_check
      _
    $region3: #{_forward_impl.1} parent=1 // pred_check_branch
      %12 = sbr.rel (0) target = $region5
    $region4: #{_forward_impl.1} parent=1 // pred_region
      _
    $region5: #{_forward_impl.1} parent=1 // pred_fallthru
      _
    // Predicated region
    $region6: #{_forward_impl.1} parent=1 // pred_check
      _
    $region7: #{_forward_impl.1} parent=1 // pred_check_branch
      %14 = sbr.rel (0) target = $region9
    $region8: #{_forward_impl.1} parent=1 // pred_region
      _
    $region9: #{_forward_impl.1} parent=1 // pred_fallthru
      _
    // Predicated region
    $region10: #{_forward_impl.1} parent=1 // pred_check
      _
    $region11: #{_forward_impl.1} parent=1 // pred_check_branch
      %16 = sbr.rel (0) target = $region13
    $region12: #{_forward_impl.1} parent=1 // pred_region
      %s18 = ssub.s32 6144, 6144
      %19 = vsyncadd [#allocation3], %s18
      %s20 = sshll.u32 [#allocation2], 4
      %s21 = int_to_ptr.vmem [resolvable:$true] %s20
      %26 = dma.hbm_to_vmem [thread:$0]  %s2, 6144, %s21, [#allocation3], 64, 64, 4
    $region13: #{_forward_impl.1} parent=1 // pred_fallthru
      _
    // Predicated region
    $region14: #{_forward_impl.1} parent=1 // pred_check
      _
    $region15: #{_forward_impl.1} parent=1 // pred_check_branch
      %28 = sbr.rel (0) target = $region17
    $region16: #{_forward_impl.1} parent=1 // pred_region
      %s30 = ssub.s32 16, 16
      %31 = vsyncadd [#allocation5], %s30
      %s33 = sshll.u32 [#allocation4], 4
      %s34 = int_to_ptr.vmem [resolvable:$true] %s33
      %36 = dma.hbm_to_vmem [thread:$0]  %s3, 16, %s34, [#allocation5]
    $region17: #{_forward_impl.1} parent=1 // pred_fallthru
      _
    // Predicated region
    $region18: #{_forward_impl.1} parent=1 // pred_check
      _
    $region19: #{_forward_impl.1} parent=1 // pred_check_branch
      %38 = sbr.rel (0) target = $region21
    $region20: #{_forward_impl.1} parent=1 // pred_region
      %39 = dma.done [#allocation3], 6144
    $region21: #{_forward_impl.1} parent=1 // pred_fallthru
      _
    // Predicated region
    $region22: #{_forward_impl.1} parent=1 // pred_check
      _
    $region23: #{_forward_impl.1} parent=1 // pred_check_branch
      %41 = sbr.rel (0) target = $region25
    $region24: #{_forward_impl.1} parent=1 // pred_region
      %42 = dma.done [#allocation5], 16
    $region25: #{_forward_impl.1} parent=1 // pred_fallthru
      _
    %v44 = vld [vmem:[%s0] sm:$0xff]
    %v45 = vld [vmem:[%s0 + $0x8] sm:$0xff]
    %v46 = vld [vmem:[%s0 + $0x10] sm:$0xff]
    %v47 = vld [vmem:[%s0 + $0x18] sm:$0xff]
    %v48 = vld [vmem:[%s0 + $0x20] sm:$0xff]
    %v49 = vld [vmem:[%s0 + $0x28] sm:$0xff]
    %v50 = vld [vmem:[%s1] sm:$0xf]
    %v51 = vld [vmem:[%s1 + $0x4] sm:$0xf]
    %53 = vset.pattern.permute.xlu0 0
    %54 = vperm.xlu0 %53, %v50
    %v55 = vpop.permute.xlu0 %54
    %v58 = vunpack.c.l.s4 839922192
    %v59 = vunpack.c.0.s8 %v58
    %v60 = vlaneseq
    %v61 = vshrl.u32 %v60, 7
    %v62 = vsub.s32 %v59, %v61
    %v63 = vrot.slane %v55, %v62
    %65 = vset.pattern.permute.xlu0 0
    %66 = vperm.xlu0 %65, %v51
    %v67 = vpop.permute.xlu0 %66
    %v70 = vunpack.c.l.s4 839922192
    %v71 = vunpack.c.0.s8 %v70
    %v72 = vlaneseq
    %v73 = vshrl.u32 %v72, 7
    %v74 = vsub.s32 %v71, %v73
    %v75 = vrot.slane %v67, %v74
    %v76 = vmul.bf16 %v44, %v63
    %v77 = vmul.bf16 %v45, %v63
    %v78 = vmul.bf16 %v46, %v63
    %v79 = vmul.bf16 %v47, %v75
    %v80 = vmul.bf16 %v48, %v75
    %v81 = vmul.bf16 %v49, %v75
    %v82 = vld [vmem:[#allocation2] sm:$0xf]
    %v83 = vld [vmem:[#allocation2 + $0x4] sm:$0xf]
    %v84 = vld [vmem:[#allocation2 + $0x8] sm:$0xf]
    %v85 = vld [vmem:[#allocation2 + $0xc] sm:$0xf]
    %v86 = vld [vmem:[#allocation2 + $0x10] sm:$0xf]
    %v87 = vld [vmem:[#allocation2 + $0x14] sm:$0xf]
    %v88 = vld [vmem:[#allocation2 + $0x18] sm:$0xf]
    %v89 = vld [vmem:[#allocation2 + $0x1c] sm:$0xf]
    %v90 = vld [vmem:[#allocation2 + $0x20] sm:$0xf]
    %v91 = vld [vmem:[#allocation2 + $0x24] sm:$0xf]
    %v92 = vld [vmem:[#allocation2 + $0x28] sm:$0xf]
    %v93 = vld [vmem:[#allocation2 + $0x2c] sm:$0xf]
    %v94 = vld [vmem:[#allocation2 + $0x30] sm:$0xf]
    %v95 = vld [vmem:[#allocation2 + $0x34] sm:$0xf]
    %v96 = vld [vmem:[#allocation2 + $0x38] sm:$0xf]
    %v97 = vld [vmem:[#allocation2 + $0x3c] sm:$0xf]
    %v98 = vld [vmem:[#allocation2 + $0x40] sm:$0xf]
    %v99 = vld [vmem:[#allocation2 + $0x44] sm:$0xf]
    %v100 = vld [vmem:[#allocation2 + $0x48] sm:$0xf]
    %v101 = vld [vmem:[#allocation2 + $0x4c] sm:$0xf]
    %v102 = vld [vmem:[#allocation2 + $0x50] sm:$0xf]
    %v103 = vld [vmem:[#allocation2 + $0x54] sm:$0xf]
    %v104 = vld [vmem:[#allocation2 + $0x58] sm:$0xf]
    %v105 = vld [vmem:[#allocation2 + $0x5c] sm:$0xf]
    %v106 = vld [vmem:[#allocation2 + $0x60] sm:$0xf]
    %v107 = vld [vmem:[#allocation2 + $0x64] sm:$0xf]
    %v108 = vld [vmem:[#allocation2 + $0x68] sm:$0xf]
    %v109 = vld [vmem:[#allocation2 + $0x6c] sm:$0xf]
    %v110 = vld [vmem:[#allocation2 + $0x70] sm:$0xf]
    %v111 = vld [vmem:[#allocation2 + $0x74] sm:$0xf]
    %v112 = vld [vmem:[#allocation2 + $0x78] sm:$0xf]
    %v113 = vld [vmem:[#allocation2 + $0x7c] sm:$0xf]
    %v114 = vld [vmem:[#allocation2 + $0x80] sm:$0xf]
    %v115 = vld [vmem:[#allocation2 + $0x84] sm:$0xf]
    %v116 = vld [vmem:[#allocation2 + $0x88] sm:$0xf]
    %v117 = vld [vmem:[#allocation2 + $0x8c] sm:$0xf]
    %v118 = vld [vmem:[#allocation2 + $0x90] sm:$0xf]
    %v119 = vld [vmem:[#allocation2 + $0x94] sm:$0xf]
    %v120 = vld [vmem:[#allocation2 + $0x98] sm:$0xf]
    %v121 = vld [vmem:[#allocation2 + $0x9c] sm:$0xf]
    %v122 = vld [vmem:[#allocation2 + $0xa0] sm:$0xf]
    %v123 = vld [vmem:[#allocation2 + $0xa4] sm:$0xf]
    %v124 = vld [vmem:[#allocation2 + $0xa8] sm:$0xf]
    %v125 = vld [vmem:[#allocation2 + $0xac] sm:$0xf]
    %v126 = vld [vmem:[#allocation2 + $0xb0] sm:$0xf]
    %v127 = vld [vmem:[#allocation2 + $0xb4] sm:$0xf]
    %v128 = vld [vmem:[#allocation2 + $0xb8] sm:$0xf]
    %v129 = vld [vmem:[#allocation2 + $0xbc] sm:$0xf]
    %v130 = vld [vmem:[#allocation2 + $0xc0] sm:$0xf]
    %v131 = vld [vmem:[#allocation2 + $0xc4] sm:$0xf]
    %v132 = vld [vmem:[#allocation2 + $0xc8] sm:$0xf]
    %v133 = vld [vmem:[#allocation2 + $0xcc] sm:$0xf]
    %v134 = vld [vmem:[#allocation2 + $0xd0] sm:$0xf]
    %v135 = vld [vmem:[#allocation2 + $0xd4] sm:$0xf]
    %v136 = vld [vmem:[#allocation2 + $0xd8] sm:$0xf]
    %v137 = vld [vmem:[#allocation2 + $0xdc] sm:$0xf]
    %v138 = vld [vmem:[#allocation2 + $0xe0] sm:$0xf]
    %v139 = vld [vmem:[#allocation2 + $0xe4] sm:$0xf]
    %v140 = vld [vmem:[#allocation2 + $0xe8] sm:$0xf]
    %v141 = vld [vmem:[#allocation2 + $0xec] sm:$0xf]
    %v142 = vld [vmem:[#allocation2 + $0xf0] sm:$0xf]
    %v143 = vld [vmem:[#allocation2 + $0xf4] sm:$0xf]
    %v144 = vld [vmem:[#allocation2 + $0xf8] sm:$0xf]
    %v145 = vld [vmem:[#allocation2 + $0xfc] sm:$0xf]
    %v146 = vld [vmem:[#allocation2 + $0x100] sm:$0xf]
    %v147 = vld [vmem:[#allocation2 + $0x104] sm:$0xf]
    %v148 = vld [vmem:[#allocation2 + $0x108] sm:$0xf]
    %v149 = vld [vmem:[#allocation2 + $0x10c] sm:$0xf]
    %v150 = vld [vmem:[#allocation2 + $0x110] sm:$0xf]
    %v151 = vld [vmem:[#allocation2 + $0x114] sm:$0xf]
    %v152 = vld [vmem:[#allocation2 + $0x118] sm:$0xf]
    %v153 = vld [vmem:[#allocation2 + $0x11c] sm:$0xf]
    %v154 = vld [vmem:[#allocation2 + $0x120] sm:$0xf]
    %v155 = vld [vmem:[#allocation2 + $0x124] sm:$0xf]
    %v156 = vld [vmem:[#allocation2 + $0x128] sm:$0xf]
    %v157 = vld [vmem:[#allocation2 + $0x12c] sm:$0xf]
    %v158 = vld [vmem:[#allocation2 + $0x130] sm:$0xf]
    %v159 = vld [vmem:[#allocation2 + $0x134] sm:$0xf]
    %v160 = vld [vmem:[#allocation2 + $0x138] sm:$0xf]
    %v161 = vld [vmem:[#allocation2 + $0x13c] sm:$0xf]
    %v162 = vld [vmem:[#allocation2 + $0x140] sm:$0xf]
    %v163 = vld [vmem:[#allocation2 + $0x144] sm:$0xf]
    %v164 = vld [vmem:[#allocation2 + $0x148] sm:$0xf]
    %v165 = vld [vmem:[#allocation2 + $0x14c] sm:$0xf]
    %v166 = vld [vmem:[#allocation2 + $0x150] sm:$0xf]
    %v167 = vld [vmem:[#allocation2 + $0x154] sm:$0xf]
    %v168 = vld [vmem:[#allocation2 + $0x158] sm:$0xf]
    %v169 = vld [vmem:[#allocation2 + $0x15c] sm:$0xf]
    %v170 = vld [vmem:[#allocation2 + $0x160] sm:$0xf]
    %v171 = vld [vmem:[#allocation2 + $0x164] sm:$0xf]
    %v172 = vld [vmem:[#allocation2 + $0x168] sm:$0xf]
    %v173 = vld [vmem:[#allocation2 + $0x16c] sm:$0xf]
    %v174 = vld [vmem:[#allocation2 + $0x170] sm:$0xf]
    %v175 = vld [vmem:[#allocation2 + $0x174] sm:$0xf]
    %v176 = vld [vmem:[#allocation2 + $0x178] sm:$0xf]
    %v177 = vld [vmem:[#allocation2 + $0x17c] sm:$0xf]
    %v178 = vld [vmem:[#allocation4] sm:$0x1]
    %v180 = vlaneseq
    %v181 = vshrl.u32 %v180, 7
    %v182 = vsub.s32 0, %v181
    %v183 = vrot.slane %v178, %v182
    %v191 = vunpack.c.l.b16 %v76
    %v192 = vunpack.c.h.b16 %v76
    %v193 = vunpack.c.l.b16 %v77
    %v194 = vunpack.c.h.b16 %v77
    %v195 = vunpack.c.l.b16 %v78
    %v196 = vunpack.c.h.b16 %v78
    %v197 = vunpack.c.l.b16 %v79
    %v198 = vunpack.c.h.b16 %v79
    %v199 = vunpack.c.l.b16 %v80
    %v200 = vunpack.c.h.b16 %v80
    %v201 = vunpack.c.l.b16 %v81
    %v202 = vunpack.c.h.b16 %v81
    %v203 = vpack.c.b16 %v197, %v191
    %v204 = vpack.c.b16 %v198, %v192
    %v205 = vpack.c.b16 %v199, %v193
    %v206 = vpack.c.b16 %v200, %v194
    %v207 = vpack.c.b16 %v201, %v195
    %v208 = vpack.c.b16 %v202, %v196
    %v311 = vunpack.c.l.b16 %v82
    %v312 = vunpack.c.l.b16 %v83
    %v313 = vunpack.c.l.b16 %v84
    %v314 = vunpack.c.l.b16 %v85
    %v315 = vunpack.c.l.b16 %v86
    %v316 = vunpack.c.l.b16 %v87
    %v317 = vunpack.c.l.b16 %v88
    %v318 = vunpack.c.l.b16 %v89
    %v319 = vunpack.c.l.b16 %v90
    %v320 = vunpack.c.l.b16 %v91
    %v321 = vunpack.c.l.b16 %v92
    %v322 = vunpack.c.l.b16 %v93
    %v323 = vunpack.c.l.b16 %v94
    %v324 = vunpack.c.l.b16 %v95
    %v325 = vunpack.c.l.b16 %v96
    %v326 = vunpack.c.l.b16 %v97
    %v327 = vunpack.c.l.b16 %v98
    %v328 = vunpack.c.l.b16 %v99
    %v329 = vunpack.c.l.b16 %v100
    %v330 = vunpack.c.l.b16 %v101
    %v331 = vunpack.c.l.b16 %v102
    %v332 = vunpack.c.l.b16 %v103
    %v333 = vunpack.c.l.b16 %v104
    %v334 = vunpack.c.l.b16 %v105
    %v335 = vunpack.c.l.b16 %v106
    %v336 = vunpack.c.l.b16 %v107
    %v337 = vunpack.c.l.b16 %v108
    %v338 = vunpack.c.l.b16 %v109
    %v339 = vunpack.c.l.b16 %v110
    %v340 = vunpack.c.l.b16 %v111
    %v341 = vunpack.c.l.b16 %v112
    %v342 = vunpack.c.l.b16 %v113
    %v343 = vunpack.c.l.b16 %v114
    %v344 = vunpack.c.l.b16 %v115
    %v345 = vunpack.c.l.b16 %v116
    %v346 = vunpack.c.l.b16 %v117
    %v347 = vunpack.c.l.b16 %v118
    %v348 = vunpack.c.l.b16 %v119
    %v349 = vunpack.c.l.b16 %v120
    %v350 = vunpack.c.l.b16 %v121
    %v351 = vunpack.c.l.b16 %v122
    %v352 = vunpack.c.l.b16 %v123
    %v353 = vunpack.c.l.b16 %v124
    %v354 = vunpack.c.l.b16 %v125
    %v355 = vunpack.c.l.b16 %v126
    %v356 = vunpack.c.l.b16 %v127
    %v357 = vunpack.c.l.b16 %v128
    %v358 = vunpack.c.l.b16 %v129
    %v359 = vunpack.c.l.b16 %v130
    %v360 = vunpack.c.l.b16 %v131
    %v361 = vunpack.c.l.b16 %v132
    %v362 = vunpack.c.l.b16 %v133
    %v363 = vunpack.c.l.b16 %v134
    %v364 = vunpack.c.l.b16 %v135
    %v365 = vunpack.c.l.b16 %v136
    %v366 = vunpack.c.l.b16 %v137
    %v367 = vunpack.c.l.b16 %v138
    %v368 = vunpack.c.l.b16 %v139
    %v369 = vunpack.c.l.b16 %v140
    %v370 = vunpack.c.l.b16 %v141
    %v371 = vunpack.c.l.b16 %v142
    %v372 = vunpack.c.l.b16 %v143
    %v373 = vunpack.c.l.b16 %v144
    %v374 = vunpack.c.l.b16 %v145
    %v375 = vunpack.c.l.b16 %v146
    %v376 = vunpack.c.l.b16 %v147
    %v377 = vunpack.c.l.b16 %v148
    %v378 = vunpack.c.l.b16 %v149
    %v379 = vunpack.c.l.b16 %v150
    %v380 = vunpack.c.l.b16 %v151
    %v381 = vunpack.c.l.b16 %v152
    %v382 = vunpack.c.l.b16 %v153
    %v383 = vunpack.c.l.b16 %v154
    %v384 = vunpack.c.l.b16 %v155
    %v385 = vunpack.c.l.b16 %v156
    %v386 = vunpack.c.l.b16 %v157
    %v387 = vunpack.c.l.b16 %v158
    %v388 = vunpack.c.l.b16 %v159
    %v389 = vunpack.c.l.b16 %v160
    %v390 = vunpack.c.l.b16 %v161
    %v391 = vunpack.c.l.b16 %v162
    %v392 = vunpack.c.l.b16 %v163
    %v393 = vunpack.c.l.b16 %v164
    %v394 = vunpack.c.l.b16 %v165
    %v395 = vunpack.c.l.b16 %v166
    %v396 = vunpack.c.l.b16 %v167
    %v397 = vunpack.c.l.b16 %v168
    %v398 = vunpack.c.l.b16 %v169
    %v399 = vunpack.c.l.b16 %v170
    %v400 = vunpack.c.l.b16 %v171
    %v401 = vunpack.c.l.b16 %v172
    %v402 = vunpack.c.l.b16 %v173
    %v403 = vunpack.c.l.b16 %v174
    %v404 = vunpack.c.l.b16 %v175
    %v405 = vunpack.c.l.b16 %v176
    %v406 = vunpack.c.l.b16 %v177
    %v407 = vpack.c.b16 %v312, %v311
    %v408 = vpack.c.b16 %v314, %v313
    %v409 = vpack.c.b16 %v316, %v315
    %v410 = vpack.c.b16 %v318, %v317
    %v411 = vpack.c.b16 %v320, %v319
    %v412 = vpack.c.b16 %v322, %v321
    %v413 = vpack.c.b16 %v324, %v323
    %v414 = vpack.c.b16 %v326, %v325
    %v415 = vpack.c.b16 %v328, %v327
    %v416 = vpack.c.b16 %v330, %v329
    %v417 = vpack.c.b16 %v332, %v331
    %v418 = vpack.c.b16 %v334, %v333
    %v419 = vpack.c.b16 %v336, %v335
    %v420 = vpack.c.b16 %v338, %v337
    %v421 = vpack.c.b16 %v340, %v339
    %v422 = vpack.c.b16 %v342, %v341
    %v423 = vpack.c.b16 %v344, %v343
    %v424 = vpack.c.b16 %v346, %v345
    %v425 = vpack.c.b16 %v348, %v347
    %v426 = vpack.c.b16 %v350, %v349
    %v427 = vpack.c.b16 %v352, %v351
    %v428 = vpack.c.b16 %v354, %v353
    %v429 = vpack.c.b16 %v356, %v355
    %v430 = vpack.c.b16 %v358, %v357
    %v431 = vpack.c.b16 %v360, %v359
    %v432 = vpack.c.b16 %v362, %v361
    %v433 = vpack.c.b16 %v364, %v363
    %v434 = vpack.c.b16 %v366, %v365
    %v435 = vpack.c.b16 %v368, %v367
    %v436 = vpack.c.b16 %v370, %v369
    %v437 = vpack.c.b16 %v372, %v371
    %v438 = vpack.c.b16 %v374, %v373
    %v439 = vpack.c.b16 %v376, %v375
    %v440 = vpack.c.b16 %v378, %v377
    %v441 = vpack.c.b16 %v380, %v379
    %v442 = vpack.c.b16 %v382, %v381
    %v443 = vpack.c.b16 %v384, %v383
    %v444 = vpack.c.b16 %v386, %v385
    %v445 = vpack.c.b16 %v388, %v387
    %v446 = vpack.c.b16 %v390, %v389
    %v447 = vpack.c.b16 %v392, %v391
    %v448 = vpack.c.b16 %v394, %v393
    %v449 = vpack.c.b16 %v396, %v395
    %v450 = vpack.c.b16 %v398, %v397
    %v451 = vpack.c.b16 %v400, %v399
    %v452 = vpack.c.b16 %v402, %v401
    %v453 = vpack.c.b16 %v404, %v403
    %v454 = vpack.c.b16 %v406, %v405
    %503 = vmatprep.subr.bf16.mxu0 0
    %504 = vmatpush1.bf16.msra.mxu0 %v414
    %505 = vmatprep.subr.bf16.mxu0 0
    %506 = vmatpush1.bf16.msra.mxu0 %v413
    %507 = vmatprep.subr.bf16.mxu0 0
    %508 = vmatpush1.bf16.msra.mxu0 %v412
    %509 = vmatprep.subr.bf16.mxu0 0
    %510 = vmatpush1.bf16.msra.mxu0 %v411
    %511 = vmatprep.subr.bf16.mxu0 0
    %512 = vmatpush1.bf16.msra.mxu0 %v410
    %513 = vmatprep.subr.bf16.mxu0 0
    %514 = vmatpush1.bf16.msra.mxu0 %v409
    %515 = vmatprep.subr.bf16.mxu0 0
    %516 = vmatpush1.bf16.msra.mxu0 %v408
    %517 = vmatprep.subr.bf16.mxu0 0
    %518 = vmatpush1.bf16.msra.mxu0 %v407
    %519 = vmatprep.subr.bf16.mxu0 0
    %520 = vmatpush2.bf16.msra.mxu0 %v422
    %521 = vmatprep.subr.bf16.mxu0 0
    %522 = vmatpush2.bf16.msra.mxu0 %v421
    %523 = vmatprep.subr.bf16.mxu0 0
    %524 = vmatpush2.bf16.msra.mxu0 %v420
    %525 = vmatprep.subr.bf16.mxu0 0
    %526 = vmatpush2.bf16.msra.mxu0 %v419
    %527 = vmatprep.subr.bf16.mxu0 0
    %528 = vmatpush2.bf16.msra.mxu0 %v418
    %529 = vmatprep.subr.bf16.mxu0 0
    %530 = vmatpush2.bf16.msra.mxu0 %v417
    %531 = vmatprep.subr.bf16.mxu0 0
    %532 = vmatpush2.bf16.msra.mxu0 %v416
    %533 = vmatprep.subr.bf16.mxu0 0
    %534 = vmatpush2.bf16.msra.mxu0 %v415
    %535 = vmatprep.mubr.bf16.mxu0 %v204
    %536 = vmatmul.mubr.bf16.gmra.mxu0 %v203
    %v537 = vpop.f32.mrf.mxu0
    %v538 = vadd.f32 %v183, %v537
    %v539 = vpop.f32.mrf.mxu0
    %v540 = vpop.f32.mrf.mxu0
    %v541 = vadd.f32 %v183, %v540
    %v542 = vpop.f32.mrf.mxu0
    %543 = vdwg.mxu0
    %544 = vmatprep.subr.bf16.mxu0 0
    %545 = vmatpush1.bf16.msra.mxu0 %v430
    %546 = vmatprep.subr.bf16.mxu0 0
    %547 = vmatpush1.bf16.msra.mxu0 %v429
    %548 = vmatprep.subr.bf16.mxu0 0
    %549 = vmatpush1.bf16.msra.mxu0 %v428
    %550 = vmatprep.subr.bf16.mxu0 0
    %551 = vmatpush1.bf16.msra.mxu0 %v427
    %552 = vmatprep.subr.bf16.mxu0 0
    %553 = vmatpush1.bf16.msra.mxu0 %v426
    %554 = vmatprep.subr.bf16.mxu0 0
    %555 = vmatpush1.bf16.msra.mxu0 %v425
    %556 = vmatprep.subr.bf16.mxu0 0
    %557 = vmatpush1.bf16.msra.mxu0 %v424
    %558 = vmatprep.subr.bf16.mxu0 0
    %559 = vmatpush1.bf16.msra.mxu0 %v423
    %560 = vmatprep.subr.bf16.mxu0 0
    %561 = vmatpush2.bf16.msra.mxu0 %v438
    %562 = vmatprep.subr.bf16.mxu0 0
    %563 = vmatpush2.bf16.msra.mxu0 %v437
    %564 = vmatprep.subr.bf16.mxu0 0
    %565 = vmatpush2.bf16.msra.mxu0 %v436
    %566 = vmatprep.subr.bf16.mxu0 0
    %567 = vmatpush2.bf16.msra.mxu0 %v435
    %568 = vmatprep.subr.bf16.mxu0 0
    %569 = vmatpush2.bf16.msra.mxu0 %v434
    %570 = vmatprep.subr.bf16.mxu0 0
    %571 = vmatpush2.bf16.msra.mxu0 %v433
    %572 = vmatprep.subr.bf16.mxu0 0
    %573 = vmatpush2.bf16.msra.mxu0 %v432
    %574 = vmatprep.subr.bf16.mxu0 0
    %575 = vmatpush2.bf16.msra.mxu0 %v431
    %576 = vmatprep.mubr.bf16.mxu0 %v206
    %577 = vmatmul.mubr.bf16.gmra.mxu0 %v205
    %v578 = vpop.f32.mrf.mxu0
    %v579 = vadd.f32 %v538, %v578
    %v580 = vpop.f32.mrf.mxu0
    %v581 = vpop.f32.mrf.mxu0
    %v582 = vadd.f32 %v541, %v581
    %v583 = vpop.f32.mrf.mxu0
    %584 = vdwg.mxu0
    %585 = vmatprep.subr.bf16.mxu0 0
    %586 = vmatpush1.bf16.msra.mxu0 %v446
    %587 = vmatprep.subr.bf16.mxu0 0
    %588 = vmatpush1.bf16.msra.mxu0 %v445
    %589 = vmatprep.subr.bf16.mxu0 0
    %590 = vmatpush1.bf16.msra.mxu0 %v444
    %591 = vmatprep.subr.bf16.mxu0 0
    %592 = vmatpush1.bf16.msra.mxu0 %v443
    %593 = vmatprep.subr.bf16.mxu0 0
    %594 = vmatpush1.bf16.msra.mxu0 %v442
    %595 = vmatprep.subr.bf16.mxu0 0
    %596 = vmatpush1.bf16.msra.mxu0 %v441
    %597 = vmatprep.subr.bf16.mxu0 0
    %598 = vmatpush1.bf16.msra.mxu0 %v440
    %599 = vmatprep.subr.bf16.mxu0 0
    %600 = vmatpush1.bf16.msra.mxu0 %v439
    %601 = vmatprep.subr.bf16.mxu0 0
    %602 = vmatpush2.bf16.msra.mxu0 %v454
    %603 = vmatprep.subr.bf16.mxu0 0
    %604 = vmatpush2.bf16.msra.mxu0 %v453
    %605 = vmatprep.subr.bf16.mxu0 0
    %606 = vmatpush2.bf16.msra.mxu0 %v452
    %607 = vmatprep.subr.bf16.mxu0 0
    %608 = vmatpush2.bf16.msra.mxu0 %v451
    %609 = vmatprep.subr.bf16.mxu0 0
    %610 = vmatpush2.bf16.msra.mxu0 %v450
    %611 = vmatprep.subr.bf16.mxu0 0
    %612 = vmatpush2.bf16.msra.mxu0 %v449
    %613 = vmatprep.subr.bf16.mxu0 0
    %614 = vmatpush2.bf16.msra.mxu0 %v448
    %615 = vmatprep.subr.bf16.mxu0 0
    %616 = vmatpush2.bf16.msra.mxu0 %v447
    %617 = vmatprep.mubr.bf16.mxu0 %v208
    %618 = vmatmul.mubr.bf16.gmra.mxu0 %v207
    %v619 = vpop.f32.mrf.mxu0
    %v620 = vadd.f32 %v579, %v619
    %v621 = vpop.f32.mrf.mxu0
    %v622 = vpop.f32.mrf.mxu0
    %v623 = vadd.f32 %v582, %v622
    %v624 = vpop.f32.mrf.mxu0
    %625 = vdwg.mxu0
    %626 = vmax.xlane.f32.xlu0 %v620
    %v627 = vpop.xlane.xlu0 %626
    %628 = vmax.xlane.f32.xlu0 %v623
    %v629 = vpop.xlane.xlu0 %628
    %v630 = vsub.f32 %v620, %v627
    %v631 = vsub.f32 %v623, %v629
    %v632 = vmul.f32 %v630, 1.442695
    %v633 = vpow.pop %v632
    %v634 = vmul.f32 %v631, 1.442695
    %v635 = vpow.pop %v634
    %636 = vadd.xlane.f32.xlu0 %v633
    %v637 = vpop.xlane.xlu0 %636
    %638 = vadd.xlane.f32.xlu0 %v635
    %v639 = vpop.xlane.xlu0 %638
    %v640 = vlog2.pop %v637
    %v641 = vmul.f32 %v640, 0.6931472
    %v642 = vlog2.pop %v639
    %v643 = vmul.f32 %v642, 0.6931472
    %v644 = vsub.f32 %v630, %v641
    %v645 = vsub.f32 %v631, %v643
    %646 = vst [vmem:[%s4] sm:$0xff] %v644
    %647 = vst [vmem:[%s4 + $0x8] sm:$0xff] %v645
    // Predicated region
    $region26: #{_forward_impl.1} parent=1 // pred_check
      _
    $region27: #{_forward_impl.1} parent=1 // pred_check_branch
      %649 = sbr.rel (0) target = $region29
    $region28: #{_forward_impl.1} parent=1 // pred_region
      _
    $region29: #{_forward_impl.1} parent=1 // pred_fallthru
      _
    // Predicated region
    $region30: #{_forward_impl.1} parent=1 // pred_check
      _
    $region31: #{_forward_impl.1} parent=1 // pred_check_branch
      %651 = sbr.rel (0) target = $region33
    $region32: #{_forward_impl.1} parent=1 // pred_region
      _
    $region33: #{_forward_impl.1} parent=1 // pred_fallthru
      _
    %652 = vsyncpa [#allocation3], 1
    %653 = vsyncpa [#allocation5], 1

</llo_original>
